<compile_context>
chip_gen: v5e
topology: v5e:2x2
jax: 0.10.0
libtpu: 0.0.40
codegen_flags: <defaults>
</compile_context>

<pallas_src>
import jax
import jax.numpy as jnp
from jax.experimental import pallas as pl
from jax.experimental.pallas import tpu as pltpu


def mlp_kernel(x_ref, w1_ref, b1_ref, w2_ref, b2_ref,
               w3_ref, b3_ref, w4_ref, b4_ref, o_ref):
    # x: (1, TM)  -- batch on the lane axis.
    x = x_ref[...]

    # Layer 1: Linear(1, H) + ReLU.
    # w1: (H, 1), b1: (H, 1)  ->  broadcast multiply gives (H, TM).
    h = jnp.maximum(w1_ref[...] * x + b1_ref[...], 0.0)

    # Layer 2: Linear(H, H) + ReLU  (MXU matmul, batch on the long N dim).
    h = jnp.maximum(
        jnp.dot(w2_ref[...], h, preferred_element_type=jnp.float32) + b2_ref[...],
        0.0)

    # Layer 3: Linear(H, H) + ReLU.
    h = jnp.maximum(
        jnp.dot(w3_ref[...], h, preferred_element_type=jnp.float32) + b3_ref[...],
        0.0)

    # Layer 4: Linear(H, 1).
    # w4 is W4^T laid out as (H, 1); contract over the sublane axis -> (1, TM).
    # Output block is lane-dense (1, TM) -> unmasked stores.
    o_ref[...] = jnp.sum(w4_ref[...] * h, axis=0, keepdims=True) + b4_ref[0]


def _round_up(a, b):
    return ((a + b - 1) // b) * b


def mlp_forward(x, params, *, max_tile=512):
    """x: (N, 1) float32.  params: kernel-layout dict (see init_params)."""
    n = x.shape[0]
    hidden = params["w2"].shape[0]

    # Batch tile: multiple of 128 (lane width), capped at max_tile.
    tm = min(max_tile, _round_up(max(n, 1), 128))
    n_pad = _round_up(n, tm)
    grid = (n_pad // tm,)

    # Batch onto the lane axis, zero-padded to a whole number of tiles.
    x_t = jnp.zeros((1, n_pad), jnp.float32).at[0, :n].set(x[:, 0])

    const = lambda i: (0, 0)  # weights/biases: same (full-array) block every step
    in_specs = [
        pl.BlockSpec((1, tm), lambda i: (0, i)),                    # x tile
        pl.BlockSpec((hidden, 1), const),                           # w1
        pl.BlockSpec((hidden, 1), const),                           # b1
        pl.BlockSpec((hidden, hidden), const),                      # w2
        pl.BlockSpec((hidden, 1), const),                           # b2
        pl.BlockSpec((hidden, hidden), const),                      # w3
        pl.BlockSpec((hidden, 1), const),                           # b3
        pl.BlockSpec((hidden, 1), const),                           # w4 (= W4^T)
        pl.BlockSpec(memory_space=pltpu.MemorySpace.SMEM),          # b4 scalar
    ]
    out_spec = pl.BlockSpec((1, tm), lambda i: (0, i))

    out = pl.pallas_call(
        mlp_kernel,
        out_shape=jax.ShapeDtypeStruct((1, n_pad), jnp.float32),
        grid=grid,
        in_specs=in_specs,
        out_specs=out_spec,
        compiler_params=pltpu.CompilerParams(
            dimension_semantics=("parallel",)),
    )(x_t,
      params["w1"], params["b1"], params["w2"], params["b2"],
      params["w3"], params["b3"], params["w4"], params["b4"])

    return out[0, :n].reshape(n, 1)


def init_params(key, hidden):
    """Deterministic init mirroring PyTorch nn.Linear default
    (uniform in [-1/sqrt(fan_in), 1/sqrt(fan_in)]), stored in kernel layout."""
    ks = jax.random.split(key, 8)

    def unif(k, shape, fan_in):
        bound = 1.0 / jnp.sqrt(float(fan_in))
        return jax.random.uniform(k, shape, jnp.float32, -bound, bound)

    return {
        "w1": unif(ks[0], (hidden, 1), 1),        # Linear(1,H) weight (out,in)
        "b1": unif(ks[1], (hidden, 1), 1),
        "w2": unif(ks[2], (hidden, hidden), hidden),
        "b2": unif(ks[3], (hidden, 1), hidden),
        "w3": unif(ks[4], (hidden, hidden), hidden),
        "b3": unif(ks[5], (hidden, 1), hidden),
        "w4": unif(ks[6], (hidden, 1), hidden),   # Linear(H,1) weight, stored as W4^T
        "b4": unif(ks[7], (1,), hidden),          # scalar bias (SMEM)
    }


def mlp_reference(x, p):
    """Pure-JAX reference in the standard (N, features) orientation."""
    h = jnp.maximum(x @ p["w1"].T + p["b1"].T, 0.0)
    h = jnp.maximum(h @ p["w2"].T + p["b2"].T, 0.0)
    h = jnp.maximum(h @ p["w3"].T + p["b3"].T, 0.0)
    return h @ p["w4"] + p["b4"]


if __name__ == "__main__":
    key = jax.random.PRNGKey(0)
    k_param, k_x1, k_x2 = jax.random.split(key, 3)

    hidden = 32   # neural_num
    params = init_params(k_param, hidden)

    # Small batch (single tile).
    x_small = jax.random.normal(k_x1, (8, 1), jnp.float32)
    out_small = jax.block_until_ready(mlp_forward(x_small, params))
    ref_small = mlp_reference(x_small, params)
    assert out_small.shape == (8, 1)
    assert jnp.allclose(out_small, ref_small, atol=1e-5, rtol=1e-5)

    # Larger batch exercising the grid (multiple pipelined tiles + padding).
    x_big = jax.random.normal(k_x2, (1200, 1), jnp.float32)
    out_big = jax.block_until_ready(mlp_forward(x_big, params))
    ref_big = mlp_reference(x_big, params)
    assert out_big.shape == (1200, 1)
    assert jnp.allclose(out_big, ref_big, atol=1e-5, rtol=1e-5)

    print("KERNEL_OK")
</pallas_src>

<mosaic_0001>
module attributes {stable_mosaic.version = 11 : i64} {
  func.func @mlp_kernel(%arg0: i32, %arg1: memref<1x128xf32, #tpu.memory_space<vmem>>, %arg2: memref<32x1xf32, #tpu.memory_space<vmem>>, %arg3: memref<32x1xf32, #tpu.memory_space<vmem>>, %arg4: memref<32x32xf32, #tpu.memory_space<vmem>>, %arg5: memref<32x1xf32, #tpu.memory_space<vmem>>, %arg6: memref<32x32xf32, #tpu.memory_space<vmem>>, %arg7: memref<32x1xf32, #tpu.memory_space<vmem>>, %arg8: memref<32x1xf32, #tpu.memory_space<vmem>>, %arg9: memref<1xf32, #tpu.memory_space<smem>>, %arg10: memref<1x128xf32, #tpu.memory_space<vmem>>) attributes {dimension_semantics = [#tpu.dimension_semantics<parallel>], iteration_bounds = array<i64: 1>, scalar_prefetch = 0 : i64, scratch_operands = 0 : i64, tpu.core_type = #tpu.core_type<tc>, window_params = [{transform_indices = @transform_0, window_bounds = array<i64: 1, 128>}, {pipeline_mode = #tpu.pipeline_mode<synchronous>, transform_indices = @transform_1, window_bounds = array<i64: 32, 1>}, {pipeline_mode = #tpu.pipeline_mode<synchronous>, transform_indices = @transform_2, window_bounds = array<i64: 32, 1>}, {pipeline_mode = #tpu.pipeline_mode<synchronous>, transform_indices = @transform_3, window_bounds = array<i64: 32, 32>}, {pipeline_mode = #tpu.pipeline_mode<synchronous>, transform_indices = @transform_4, window_bounds = array<i64: 32, 1>}, {pipeline_mode = #tpu.pipeline_mode<synchronous>, transform_indices = @transform_5, window_bounds = array<i64: 32, 32>}, {pipeline_mode = #tpu.pipeline_mode<synchronous>, transform_indices = @transform_6, window_bounds = array<i64: 32, 1>}, {pipeline_mode = #tpu.pipeline_mode<synchronous>, transform_indices = @transform_7, window_bounds = array<i64: 32, 1>}, {transform_indices = @transform_8, window_bounds = array<i64: 1>}, {transform_indices = @transform_9, window_bounds = array<i64: 1, 128>}]} {
    %c0 = arith.constant 0 : index
    %c0_0 = arith.constant 0 : index
    %0 = vector.load %arg1[%c0, %c0_0] : memref<1x128xf32, #tpu.memory_space<vmem>>, vector<1x128xf32>
    %c0_1 = arith.constant 0 : index
    %c0_2 = arith.constant 0 : index
    %1 = vector.load %arg2[%c0_1, %c0_2] : memref<32x1xf32, #tpu.memory_space<vmem>>, vector<32x1xf32>
    %2 = vector.broadcast %1 : vector<32x1xf32> to vector<32x128xf32>
    %3 = vector.broadcast %0 : vector<1x128xf32> to vector<32x128xf32>
    %4 = arith.mulf %2, %3 : vector<32x128xf32>
    %c0_3 = arith.constant 0 : index
    %c0_4 = arith.constant 0 : index
    %5 = vector.load %arg3[%c0_3, %c0_4] : memref<32x1xf32, #tpu.memory_space<vmem>>, vector<32x1xf32>
    %6 = vector.broadcast %5 : vector<32x1xf32> to vector<32x128xf32>
    %7 = arith.addf %4, %6 : vector<32x128xf32>
    %cst = arith.constant 0.000000e+00 : f32
    %8 = vector.broadcast %cst : f32 to vector<32x128xf32>
    %9 = arith.maximumf %7, %8 : vector<32x128xf32>
    %c0_5 = arith.constant 0 : index
    %c0_6 = arith.constant 0 : index
    %10 = vector.load %arg4[%c0_5, %c0_6] : memref<32x32xf32, #tpu.memory_space<vmem>>, vector<32x32xf32>
    %cst_7 = arith.constant dense<0.000000e+00> : vector<32x128xf32>
    %11 = tpu.matmul %10, %9, %cst_7 {dimension_numbers = #tpu.dot_dimension_numbers<[1], [0], [0], [1], [0, 0, 1, 1], [], []>} : vector<32x32xf32>, vector<32x128xf32>, vector<32x128xf32> -> vector<32x128xf32>
    %c0_8 = arith.constant 0 : index
    %c0_9 = arith.constant 0 : index
    %12 = vector.load %arg5[%c0_8, %c0_9] : memref<32x1xf32, #tpu.memory_space<vmem>>, vector<32x1xf32>
    %13 = vector.broadcast %12 : vector<32x1xf32> to vector<32x128xf32>
    %14 = arith.addf %11, %13 : vector<32x128xf32>
    %cst_10 = arith.constant 0.000000e+00 : f32
    %15 = vector.broadcast %cst_10 : f32 to vector<32x128xf32>
    %16 = arith.maximumf %14, %15 : vector<32x128xf32>
    %c0_11 = arith.constant 0 : index
    %c0_12 = arith.constant 0 : index
    %17 = vector.load %arg6[%c0_11, %c0_12] : memref<32x32xf32, #tpu.memory_space<vmem>>, vector<32x32xf32>
    %cst_13 = arith.constant dense<0.000000e+00> : vector<32x128xf32>
    %18 = tpu.matmul %17, %16, %cst_13 {dimension_numbers = #tpu.dot_dimension_numbers<[1], [0], [0], [1], [0, 0, 1, 1], [], []>} : vector<32x32xf32>, vector<32x128xf32>, vector<32x128xf32> -> vector<32x128xf32>
    %c0_14 = arith.constant 0 : index
    %c0_15 = arith.constant 0 : index
    %19 = vector.load %arg7[%c0_14, %c0_15] : memref<32x1xf32, #tpu.memory_space<vmem>>, vector<32x1xf32>
    %20 = vector.broadcast %19 : vector<32x1xf32> to vector<32x128xf32>
    %21 = arith.addf %18, %20 : vector<32x128xf32>
    %cst_16 = arith.constant 0.000000e+00 : f32
    %22 = vector.broadcast %cst_16 : f32 to vector<32x128xf32>
    %23 = arith.maximumf %21, %22 : vector<32x128xf32>
    %c0_17 = arith.constant 0 : index
    %c0_18 = arith.constant 0 : index
    %24 = vector.load %arg8[%c0_17, %c0_18] : memref<32x1xf32, #tpu.memory_space<vmem>>, vector<32x1xf32>
    %25 = vector.broadcast %24 : vector<32x1xf32> to vector<32x128xf32>
    %26 = arith.mulf %25, %23 : vector<32x128xf32>
    %cst_19 = arith.constant dense<0.000000e+00> : vector<128xf32>
    %27 = vector.multi_reduction <add>, %26, %cst_19 [0] : vector<32x128xf32> to vector<128xf32>
    %28 = vector.shape_cast %27 : vector<128xf32> to vector<1x128xf32>
    %c0_20 = arith.constant 0 : index
    %29 = memref.load %arg9[%c0_20] : memref<1xf32, #tpu.memory_space<smem>>
    %30 = vector.broadcast %29 : f32 to vector<1x128xf32>
    %31 = arith.addf %28, %30 : vector<1x128xf32>
    %c0_21 = arith.constant 0 : index
    %c0_22 = arith.constant 0 : index
    %32 = vector.load %arg10[%c0_21, %c0_22] : memref<1x128xf32, #tpu.memory_space<vmem>>, vector<1x128xf32>
    tpu.vector_store %arg10[%c0_21, %c0_22], %31 {strides = array<i32>} : memref<1x128xf32, #tpu.memory_space<vmem>>, vector<1x128xf32>,
    return
  }
  func.func @transform_0(%arg0: i32) -> (i32, i32) {
    %c0_i32 = arith.constant 0 : i32
    %c0_i32_0 = arith.constant 0 : i32
    return %c0_i32, %arg0 : i32, i32
  }
  func.func @transform_1(%arg0: i32) -> (i32, i32) {
    %c0_i32 = arith.constant 0 : i32
    %c0_i32_0 = arith.constant 0 : i32
    %c0_i32_1 = arith.constant 0 : i32
    return %c0_i32, %c0_i32_0 : i32, i32
  }
  func.func @transform_2(%arg0: i32) -> (i32, i32) {
    %c0_i32 = arith.constant 0 : i32
    %c0_i32_0 = arith.constant 0 : i32
    %c0_i32_1 = arith.constant 0 : i32
    return %c0_i32, %c0_i32_0 : i32, i32
  }
  func.func @transform_3(%arg0: i32) -> (i32, i32) {
    %c0_i32 = arith.constant 0 : i32
    %c0_i32_0 = arith.constant 0 : i32
    %c0_i32_1 = arith.constant 0 : i32
    return %c0_i32, %c0_i32_0 : i32, i32
  }
  func.func @transform_4(%arg0: i32) -> (i32, i32) {
    %c0_i32 = arith.constant 0 : i32
    %c0_i32_0 = arith.constant 0 : i32
    %c0_i32_1 = arith.constant 0 : i32
    return %c0_i32, %c0_i32_0 : i32, i32
  }
  func.func @transform_5(%arg0: i32) -> (i32, i32) {
    %c0_i32 = arith.constant 0 : i32
    %c0_i32_0 = arith.constant 0 : i32
    %c0_i32_1 = arith.constant 0 : i32
    return %c0_i32, %c0_i32_0 : i32, i32
  }
  func.func @transform_6(%arg0: i32) -> (i32, i32) {
    %c0_i32 = arith.constant 0 : i32
    %c0_i32_0 = arith.constant 0 : i32
    %c0_i32_1 = arith.constant 0 : i32
    return %c0_i32, %c0_i32_0 : i32, i32
  }
  func.func @transform_7(%arg0: i32) -> (i32, i32) {
    %c0_i32 = arith.constant 0 : i32
    %c0_i32_0 = arith.constant 0 : i32
    %c0_i32_1 = arith.constant 0 : i32
    return %c0_i32, %c0_i32_0 : i32, i32
  }
  func.func @transform_8(%arg0: i32) -> i32 {
    %c0_i32 = arith.constant 0 : i32
    %c0_i32_0 = arith.constant 0 : i32
    return %c0_i32 : i32
  }
  func.func @transform_9(%arg0: i32) -> (i32, i32) {
    %c0_i32 = arith.constant 0 : i32
    %c0_i32_0 = arith.constant 0 : i32
    return %c0_i32, %arg0 : i32, i32
  }
}

</mosaic_0001>

<llo_original>
// kernel: tpu_custom_call.1
$region0: #{tpu_custom_call.1}
  #allocation0 [shape = 'u32[]', space=smem, size = 0x4, offset = 0x4, fixed_abs, tag = 'smem constant byte address 0x4 - core index']
  #allocation1 [shape = 'u32[72,128]{1,0:T(1,128)}', space=vmem, size = 0x9000, scoped, tag = 'internal scratch']
  #allocation2 [shape = 'f32[1]{0:T(128)S(6)}', space=smem, size = 0x200, scoped, tag = 'scoped memory for tpu_custom_call.1']
  %s0 = inlined_call_operand.vmem [shape: f32[1,128], index: 0, kind: input, shape index: {}]
  %s1 = inlined_call_operand.vmem [shape: f32[32,1], index: 1, kind: input, shape index: {}]
  %s2 = inlined_call_operand.vmem [shape: f32[32,1], index: 2, kind: input, shape index: {}]
  %s3 = inlined_call_operand.vmem [shape: f32[32,32], index: 3, kind: input, shape index: {}]
  %s4 = inlined_call_operand.vmem [shape: f32[32,1], index: 4, kind: input, shape index: {}]
  %s5 = inlined_call_operand.vmem [shape: f32[32,32], index: 5, kind: input, shape index: {}]
  %s6 = inlined_call_operand.vmem [shape: f32[32,1], index: 6, kind: input, shape index: {}]
  %s7 = inlined_call_operand.vmem [shape: f32[32,1], index: 7, kind: input, shape index: {}]
  %s8 = inlined_call_operand.<no memory space> [shape: f32[1], index: 8, kind: input, shape index: {}]
  %s9 = inlined_call_operand.hbm [shape: f32[1,128], index: 9, kind: output, shape index: {}]
  %s10 = sld [smem:[#allocation0]]
  $region46: #{tpu_custom_call.1} parent=0
    _
  %s12 = ssub.s32 1, %s10
  %s13 = scalar_select 0, %s12, %s10
  %14 = sst [smem:[#allocation2]] %s8
  $region1: #{tpu_custom_call.1} parent=0
    #allocation3 [shape = 'u8[512]{0}', space=vmem, size = 0x400, scoped, tag = 'output window, operand 0, single buffered']
    #allocation4 [shape = 's32[1]{0}', space=sflag, size = 0x4, scoped, tag = 'scoped memory for tpu_custom_call.1']
    %15 = vsyncpa [#allocation4], 0
    // Predicated region
    $region2: #{tpu_custom_call.1} parent=1 // pred_check
      _
    $region3: #{tpu_custom_call.1} parent=1 // pred_check_branch
      %17 = sbr.rel (0) target = $region5
    $region4: #{tpu_custom_call.1} parent=1 // pred_region
      _
    $region5: #{tpu_custom_call.1} parent=1 // pred_fallthru
      _
    // Predicated region
    $region6: #{tpu_custom_call.1} parent=1 // pred_check
      _
    $region7: #{tpu_custom_call.1} parent=1 // pred_check_branch
      %19 = sbr.rel (0) target = $region9
    $region8: #{tpu_custom_call.1} parent=1 // pred_region
      _
    $region9: #{tpu_custom_call.1} parent=1 // pred_fallthru
      _
    // Predicated region
    $region10: #{tpu_custom_call.1} parent=1 // pred_check
      _
    $region11: #{tpu_custom_call.1} parent=1 // pred_check_branch
      %21 = sbr.rel (0) target = $region13
    $region12: #{tpu_custom_call.1} parent=1 // pred_region
      _
    $region13: #{tpu_custom_call.1} parent=1 // pred_fallthru
      _
    // Predicated region
    $region14: #{tpu_custom_call.1} parent=1 // pred_check
      _
    $region15: #{tpu_custom_call.1} parent=1 // pred_check_branch
      %23 = sbr.rel (0) target = $region17
    $region16: #{tpu_custom_call.1} parent=1 // pred_region
      _
    $region17: #{tpu_custom_call.1} parent=1 // pred_fallthru
      _
    // Predicated region
    $region18: #{tpu_custom_call.1} parent=1 // pred_check
      _
    $region19: #{tpu_custom_call.1} parent=1 // pred_check_branch
      %25 = sbr.rel (0) target = $region21
    $region20: #{tpu_custom_call.1} parent=1 // pred_region
      _
    $region21: #{tpu_custom_call.1} parent=1 // pred_fallthru
      _
    // Predicated region
    $region22: #{tpu_custom_call.1} parent=1 // pred_check
      _
    $region23: #{tpu_custom_call.1} parent=1 // pred_check_branch
      %27 = sbr.rel (0) target = $region25
    $region24: #{tpu_custom_call.1} parent=1 // pred_region
      _
    $region25: #{tpu_custom_call.1} parent=1 // pred_fallthru
      _
    // Predicated region
    $region26: #{tpu_custom_call.1} parent=1 // pred_check
      _
    $region27: #{tpu_custom_call.1} parent=1 // pred_check_branch
      %29 = sbr.rel (0) target = $region29
    $region28: #{tpu_custom_call.1} parent=1 // pred_region
      _
    $region29: #{tpu_custom_call.1} parent=1 // pred_fallthru
      _
    // Predicated region
    $region30: #{tpu_custom_call.1} parent=1 // pred_check
      _
    $region31: #{tpu_custom_call.1} parent=1 // pred_check_branch
      %31 = sbr.rel (0) target = $region33
    $region32: #{tpu_custom_call.1} parent=1 // pred_region
      _
    $region33: #{tpu_custom_call.1} parent=1 // pred_fallthru
      _
    // Predicated region
    $region34: #{tpu_custom_call.1} parent=1 // pred_check
      _
    $region35: #{tpu_custom_call.1} parent=1 // pred_check_branch
      %33 = sbr.rel (0) target = $region37
    $region36: #{tpu_custom_call.1} parent=1 // pred_region
      _
    $region37: #{tpu_custom_call.1} parent=1 // pred_fallthru
      _
    %v34 = vld [vmem:[%s0] sm:$0x1]
    %v35 = vld [vmem:[%s1] sm:$0xff]
    %v36 = vld [vmem:[%s1 + $0x8] sm:$0xff]
    %v37 = vld [vmem:[%s1 + $0x10] sm:$0xff]
    %v38 = vld [vmem:[%s1 + $0x18] sm:$0xff]
    %40 = vset.pattern.permute.xlu0 0
    %41 = vperm.xlu0 %40, %v35
    %v42 = vpop.permute.xlu0 %41
    %45 = vset.pattern.permute.xlu0 0
    %46 = vperm.xlu0 %45, %v36
    %v47 = vpop.permute.xlu0 %46
    %50 = vset.pattern.permute.xlu0 0
    %51 = vperm.xlu0 %50, %v37
    %v52 = vpop.permute.xlu0 %51
    %55 = vset.pattern.permute.xlu0 0
    %56 = vperm.xlu0 %55, %v38
    %v57 = vpop.permute.xlu0 %56
    %v60 = vperm.slane %v34, 0
    %v62 = vmul.f32 %v42, %v60
    %v63 = vmul.f32 %v47, %v60
    %v64 = vmul.f32 %v52, %v60
    %v65 = vmul.f32 %v57, %v60
    %v66 = vld [vmem:[%s2] sm:$0xff]
    %v67 = vld [vmem:[%s2 + $0x8] sm:$0xff]
    %v68 = vld [vmem:[%s2 + $0x10] sm:$0xff]
    %v69 = vld [vmem:[%s2 + $0x18] sm:$0xff]
    %71 = vset.pattern.permute.xlu0 0
    %72 = vperm.xlu0 %71, %v66
    %v73 = vpop.permute.xlu0 %72
    %76 = vset.pattern.permute.xlu0 0
    %77 = vperm.xlu0 %76, %v67
    %v78 = vpop.permute.xlu0 %77
    %81 = vset.pattern.permute.xlu0 0
    %82 = vperm.xlu0 %81, %v68
    %v83 = vpop.permute.xlu0 %82
    %86 = vset.pattern.permute.xlu0 0
    %87 = vperm.xlu0 %86, %v69
    %v88 = vpop.permute.xlu0 %87
    %v90 = vadd.f32 %v62, %v73
    %v91 = vadd.f32 %v63, %v78
    %v92 = vadd.f32 %v64, %v83
    %v93 = vadd.f32 %v65, %v88
    %v94 = vmax.f32 %v90, 0.0
    %v95 = vmax.f32 %v91, 0.0
    %v96 = vmax.f32 %v92, 0.0
    %v97 = vmax.f32 %v93, 0.0
    %v98 = vld [vmem:[%s3] sm:$0xff]
    %v99 = vld [vmem:[%s3 + $0x8] sm:$0xff]
    %v100 = vld [vmem:[%s3 + $0x10] sm:$0xff]
    %v101 = vld [vmem:[%s3 + $0x18] sm:$0xff]
    %v102 = vld [vmem:[%s4] sm:$0xff]
    %v103 = vld [vmem:[%s4 + $0x8] sm:$0xff]
    %v104 = vld [vmem:[%s4 + $0x10] sm:$0xff]
    %v105 = vld [vmem:[%s4 + $0x18] sm:$0xff]
    %107 = vset.pattern.permute.xlu0 0
    %108 = vperm.xlu0 %107, %v102
    %v109 = vpop.permute.xlu0 %108
    %112 = vset.pattern.permute.xlu0 0
    %113 = vperm.xlu0 %112, %v103
    %v114 = vpop.permute.xlu0 %113
    %117 = vset.pattern.permute.xlu0 0
    %118 = vperm.xlu0 %117, %v104
    %v119 = vpop.permute.xlu0 %118
    %122 = vset.pattern.permute.xlu0 0
    %123 = vperm.xlu0 %122, %v105
    %v124 = vpop.permute.xlu0 %123
    %vm126 = vcmask 261120
    %v128 = vsel %vm126, %v98, 0
    %v131 = vsel %vm126, %v99, 0
    %v134 = vsel %vm126, %v100, 0
    %v137 = vsel %vm126, %v101, 0
    %139 = vmatpush.msra.mxu0 0.0
    %140 = vmatpush.msra.mxu0 0.0
    %141 = vmatpush.msra.mxu0 0.0
    %142 = vmatpush.msra.mxu0 0.0
    %143 = vmatpush.msra.mxu0 0.0
    %144 = vmatpush.msra.mxu0 0.0
    %145 = vmatpush.msra.mxu0 0.0
    %146 = vmatpush.msra.mxu0 0.0
    %147 = vmatpush.msra.mxu0 0.0
    %148 = vmatpush.msra.mxu0 0.0
    %149 = vmatpush.msra.mxu0 0.0
    %150 = vmatpush.msra.mxu0 0.0
    %151 = vmatpush.msra.mxu0 %v97
    %152 = vmatpush.msra.mxu0 %v96
    %153 = vmatpush.msra.mxu0 %v95
    %154 = vmatpush.msra.mxu0 %v94
    %155 = vmatmul.f32.gmra.mxu0 %v128
    %v156 = vpop.f32.mrf.mxu0
    %v157 = vadd.f32 %v109, %v156
    %158 = vmatmul.f32.gmra.mxu0 %v131
    %v159 = vpop.f32.mrf.mxu0
    %v160 = vadd.f32 %v114, %v159
    %161 = vmatmul.f32.gmra.mxu0 %v134
    %v162 = vpop.f32.mrf.mxu0
    %v163 = vadd.f32 %v119, %v162
    %164 = vmatmul.f32.gmra.mxu0 %v137
    %v165 = vpop.f32.mrf.mxu0
    %v166 = vadd.f32 %v124, %v165
    %167 = vdwg.mxu0
    %v168 = vmax.f32 %v157, 0.0
    %v169 = vmax.f32 %v160, 0.0
    %v170 = vmax.f32 %v163, 0.0
    %v171 = vmax.f32 %v166, 0.0
    %v172 = vld [vmem:[%s5] sm:$0xff]
    %v173 = vld [vmem:[%s5 + $0x8] sm:$0xff]
    %v174 = vld [vmem:[%s5 + $0x10] sm:$0xff]
    %v175 = vld [vmem:[%s5 + $0x18] sm:$0xff]
    %v176 = vld [vmem:[%s6] sm:$0xff]
    %v177 = vld [vmem:[%s6 + $0x8] sm:$0xff]
    %v178 = vld [vmem:[%s6 + $0x10] sm:$0xff]
    %v179 = vld [vmem:[%s6 + $0x18] sm:$0xff]
    %181 = vset.pattern.permute.xlu0 0
    %182 = vperm.xlu0 %181, %v176
    %v183 = vpop.permute.xlu0 %182
    %186 = vset.pattern.permute.xlu0 0
    %187 = vperm.xlu0 %186, %v177
    %v188 = vpop.permute.xlu0 %187
    %191 = vset.pattern.permute.xlu0 0
    %192 = vperm.xlu0 %191, %v178
    %v193 = vpop.permute.xlu0 %192
    %196 = vset.pattern.permute.xlu0 0
    %197 = vperm.xlu0 %196, %v179
    %v198 = vpop.permute.xlu0 %197
    %v201 = vsel %vm126, %v172, 0
    %v204 = vsel %vm126, %v173, 0
    %v207 = vsel %vm126, %v174, 0
    %v210 = vsel %vm126, %v175, 0
    %212 = vmatpush.msra.mxu0 0.0
    %213 = vmatpush.msra.mxu0 0.0
    %214 = vmatpush.msra.mxu0 0.0
    %215 = vmatpush.msra.mxu0 0.0
    %216 = vmatpush.msra.mxu0 0.0
    %217 = vmatpush.msra.mxu0 0.0
    %218 = vmatpush.msra.mxu0 0.0
    %219 = vmatpush.msra.mxu0 0.0
    %220 = vmatpush.msra.mxu0 0.0
    %221 = vmatpush.msra.mxu0 0.0
    %222 = vmatpush.msra.mxu0 0.0
    %223 = vmatpush.msra.mxu0 0.0
    %224 = vmatpush.msra.mxu0 %v171
    %225 = vmatpush.msra.mxu0 %v170
    %226 = vmatpush.msra.mxu0 %v169
    %227 = vmatpush.msra.mxu0 %v168
    %228 = vmatmul.f32.gmra.mxu0 %v201
    %v229 = vpop.f32.mrf.mxu0
    %v230 = vadd.f32 %v183, %v229
    %231 = vmatmul.f32.gmra.mxu0 %v204
    %v232 = vpop.f32.mrf.mxu0
    %v233 = vadd.f32 %v188, %v232
    %234 = vmatmul.f32.gmra.mxu0 %v207
    %v235 = vpop.f32.mrf.mxu0
    %v236 = vadd.f32 %v193, %v235
    %237 = vmatmul.f32.gmra.mxu0 %v210
    %v238 = vpop.f32.mrf.mxu0
    %v239 = vadd.f32 %v198, %v238
    %240 = vdwg.mxu0
    %v241 = vmax.f32 %v230, 0.0
    %v242 = vmax.f32 %v233, 0.0
    %v243 = vmax.f32 %v236, 0.0
    %v244 = vmax.f32 %v239, 0.0
    %v245 = vld [vmem:[%s7] sm:$0xff]
    %v246 = vld [vmem:[%s7 + $0x8] sm:$0xff]
    %v247 = vld [vmem:[%s7 + $0x10] sm:$0xff]
    %v248 = vld [vmem:[%s7 + $0x18] sm:$0xff]
    %250 = vset.pattern.permute.xlu0 0
    %251 = vperm.xlu0 %250, %v245
    %v252 = vpop.permute.xlu0 %251
    %255 = vset.pattern.permute.xlu0 0
    %256 = vperm.xlu0 %255, %v246
    %v257 = vpop.permute.xlu0 %256
    %260 = vset.pattern.permute.xlu0 0
    %261 = vperm.xlu0 %260, %v247
    %v262 = vpop.permute.xlu0 %261
    %265 = vset.pattern.permute.xlu0 0
    %266 = vperm.xlu0 %265, %v248
    %v267 = vpop.permute.xlu0 %266
    %v269 = vmul.f32 %v252, %v241
    %v270 = vmul.f32 %v257, %v242
    %v271 = vmul.f32 %v262, %v243
    %v272 = vmul.f32 %v267, %v244
    %v273 = vadd.f32 %v269, %v270
    %v274 = vadd.f32 %v273, %v271
    %v275 = vadd.f32 %v274, %v272
    %v276 = vrot.slane %v275, 4
    %v277 = vadd.f32 %v275, %v276
    %v278 = vrot.slane %v277, 2
    %v279 = vadd.f32 %v277, %v278
    %v280 = vrot.slane %v279, 1
    %v281 = vadd.f32 %v279, %v280
    %s282 = sld [smem:[#allocation2]]
    %v283 = vstv %s282
    %v284 = vadd.f32 %v281, %v283
    %285 = vst [vmem:[#allocation3] sm:$0x1] %v284
    // Predicated region
    $region38: #{tpu_custom_call.1} parent=1 // pred_check
      _
    $region39: #{tpu_custom_call.1} parent=1 // pred_check_branch
      %287 = sbr.rel (0) target = $region41
    $region40: #{tpu_custom_call.1} parent=1 // pred_region
      %289 = vsyncadd [#allocation4], 0
      %s291 = sshll.u32 [#allocation3], 4
      %s292 = int_to_ptr.vmem [resolvable:$true] %s291
      %s293 = sshll.u32 %s9, 4
      %s294 = int_to_ptr.hbm [resolvable:$true] %s293
      %296 = dma.vmem_to_hbm [thread:$0]  %s292, 16, %s294, [#allocation4]
    $region41: #{tpu_custom_call.1} parent=1 // pred_fallthru
      _
    // Predicated region
    $region42: #{tpu_custom_call.1} parent=1 // pred_check
      _
    $region43: #{tpu_custom_call.1} parent=1 // pred_check_branch
      %298 = sbr.rel (0) target = $region45
    $region44: #{tpu_custom_call.1} parent=1 // pred_region
      %300 = dma.done [#allocation4], 16
    $region45: #{tpu_custom_call.1} parent=1 // pred_fallthru
      _
    %301 = vsyncpa [#allocation4], 1

</llo_original>
